<compile_context>
chip_gen: v7x
topology: tpu7x:2x2x1
jax: 0.10.0
libtpu: 0.0.40
codegen_flags: <defaults>
</compile_context>

<pallas_src>
import math

import jax
import jax.numpy as jnp
from jax import lax
from jax.experimental import pallas as pl
from jax.experimental.pallas import tpu as pltpu

# Large finite negative used for masking (safe under tiling/padding, unlike -inf).
_MASK_VALUE = -0.7 * float(jnp.finfo(jnp.float32).max)


def masked_attention_kernel(x_ref, w_qkv_ref, o_ref):
    # x_ref: (block_b, T, C), w_qkv_ref: (C, 3H), o_ref: (block_b, T, H)
    block_b, T, _ = x_ref.shape
    H = o_ref.shape[-1]
    inv_sqrt_h = 1.0 / math.sqrt(H)

    # Fused QKV weight, kept in native dtype (bf16-friendly for the MXU).
    w_qkv = w_qkv_ref[...]                                   # (C, 3H)

    # Causal mask, hoisted out of the batch loop.
    row = lax.broadcasted_iota(jnp.int32, (T, T), 0)
    col = lax.broadcasted_iota(jnp.int32, (T, T), 1)
    causal = row >= col

    # Small static unroll over the batch rows of this block.
    for b in range(block_b):
        x_b = x_ref[b]                                       # (T, C), native dtype

        # One fused projection: q|k|v in a single MXU push (N = 3H).
        qkv = jnp.dot(x_b, w_qkv,
                      preferred_element_type=jnp.float32)    # (T, 3H) f32 accum

        q = qkv[:, :H] * inv_sqrt_h                          # scale on (T,H), not (T,T)
        k = qkv[:, H:2 * H]
        v = qkv[:, 2 * H:3 * H]

        # scores = (q / sqrt(H)) @ k^T, contracting on H without a transpose.
        scores = lax.dot_general(
            q, k, (((1,), (1,)), ((), ())),
            preferred_element_type=jnp.float32)              # (T, T)
        scores = jnp.where(causal, scores, _MASK_VALUE)

        # Numerically-stable softmax with deferred normalization.
        m = jnp.max(scores, axis=-1, keepdims=True)          # (T, 1)
        e = jnp.exp(scores - m)                              # (T, T)
        denom = jnp.sum(e, axis=-1, keepdims=True)           # (T, 1)

        # TODO(synk): nn.Dropout(0.4) is identity in eval mode; training-mode
        # stochastic dropout is not implemented here.

        # out = (e @ v) * 1/denom  -- divide moved off the (T,T) matrix onto
        # the (T,H) result; reciprocal goes to the (otherwise idle) EUP.
        pv = jnp.dot(e.astype(x_b.dtype), v.astype(x_b.dtype),
                     preferred_element_type=jnp.float32)     # (T, H)
        out_b = pv * pl.reciprocal(denom, approx=True)

        o_ref[b] = out_b.astype(o_ref.dtype)


def masked_attention(x, wq, wk, wv, *, block_b=None):
    """x: (B, T, C); wq/wk/wv: (C, H). Returns (B, T, H)."""
    B, T, C = x.shape
    H = wq.shape[1]

    # Fuse the three projection weights once, outside the kernel.
    w_qkv = jnp.concatenate([wq, wk, wv], axis=1)            # (C, 3H)

    if block_b is None:
        # Amortize per-grid-step overhead, but keep >=2 parallel grid steps
        # when B >= 2 so dual-TC chips (v7x) have work on both cores.
        block_b = max(1, B // 2)
    block_b = max(1, min(block_b, B, 8))
    while B % block_b:
        block_b -= 1
    grid = (B // block_b,)

    return pl.pallas_call(
        masked_attention_kernel,
        out_shape=jax.ShapeDtypeStruct((B, T, H), x.dtype),
        grid_spec=pltpu.PrefetchScalarGridSpec(
            num_scalar_prefetch=0,
            grid=grid,
            in_specs=[
                pl.BlockSpec((block_b, T, C), lambda i: (i, 0, 0)),
                pl.BlockSpec((C, 3 * H), lambda i: (0, 0)),
            ],
            out_specs=pl.BlockSpec((block_b, T, H), lambda i: (i, 0, 0)),
        ),
        compiler_params=pltpu.CompilerParams(
            dimension_semantics=("parallel",)),
    )(x, w_qkv)


def reference(x, wq, wk, wv):
    q = x @ wq
    k = x @ wk
    v = x @ wv
    H = q.shape[-1]
    scores = q @ jnp.swapaxes(k, -2, -1) / math.sqrt(H)
    T = x.shape[1]
    mask = jnp.tril(jnp.ones((T, T)))
    scores = jnp.where(mask == 0, -jnp.inf, scores)
    w_att = jax.nn.softmax(scores, axis=-1)
    return w_att @ v


if __name__ == "__main__":
    # Shapes taken from the PyTorch module: emb_size=128, head_size=8,
    # sequence_len=64; small batch of 2.
    B, T, C, H = 2, 64, 128, 8

    key = jax.random.PRNGKey(0)
    kx, kq, kk, kv = jax.random.split(key, 4)

    x = jax.random.normal(kx, (B, T, C), dtype=jnp.float32)
    # deterministic "Linear(no bias)" weights, stored as (C, H)
    bound = 1.0 / math.sqrt(C)
    wq = jax.random.uniform(kq, (C, H), jnp.float32, -bound, bound)
    wk = jax.random.uniform(kk, (C, H), jnp.float32, -bound, bound)
    wv = jax.random.uniform(kv, (C, H), jnp.float32, -bound, bound)

    out = masked_attention(x, wq, wk, wv)
    out = jax.block_until_ready(out)

    ref = reference(x, wq, wk, wv)
    assert out.shape == (B, T, H)
    # Tolerance accounts for the approximate (EUP) reciprocal used for the
    # deferred softmax normalization (~2^-12 relative error).
    err = jnp.max(jnp.abs(out - ref))
    assert jnp.allclose(out, ref, atol=2e-3, rtol=2e-3), f"max abs diff {err}"

    print("KERNEL_OK")
</pallas_src>

<mosaic_0001>
module attributes {stable_mosaic.version = 11 : i64} {
  func.func @masked_attention_kernel(%arg0: i32, %arg1: memref<1x64x128xf32, #tpu.memory_space<vmem>>, %arg2: memref<128x24xf32, #tpu.memory_space<vmem>>, %arg3: memref<1x64x8xf32, #tpu.memory_space<vmem>>) attributes {dimension_semantics = [#tpu.dimension_semantics<parallel>], iteration_bounds = array<i64: 2>, scalar_prefetch = 0 : i64, scratch_operands = 0 : i64, tpu.core_type = #tpu.core_type<tc>, window_params = [{transform_indices = @transform_0, window_bounds = array<i64: 1, 64, 128>}, {pipeline_mode = #tpu.pipeline_mode<synchronous>, transform_indices = @transform_1, window_bounds = array<i64: 128, 24>}, {transform_indices = @transform_2, window_bounds = array<i64: 1, 64, 8>}]} {
    %c0 = arith.constant 0 : index
    %c0_0 = arith.constant 0 : index
    %0 = vector.load %arg2[%c0, %c0_0] : memref<128x24xf32, #tpu.memory_space<vmem>>, vector<128x24xf32>
    %1 = tpu.iota {dimensions = array<i32: 0>} : vector<64x64xi32>
    %2 = tpu.iota {dimensions = array<i32: 1>} : vector<64x64xi32>
    %3 = arith.cmpi sge, %1, %2 : vector<64x64xi32>
    %c0_1 = arith.constant 0 : index
    %c0_2 = arith.constant 0 : index
    %c0_3 = arith.constant 0 : index
    %4 = vector.load %arg1[%c0_1, %c0_2, %c0_3] : memref<1x64x128xf32, #tpu.memory_space<vmem>>, vector<1x64x128xf32>
    %5 = vector.shape_cast %4 : vector<1x64x128xf32> to vector<64x128xf32>
    %cst = arith.constant dense<0.000000e+00> : vector<64x24xf32>
    %6 = tpu.matmul %5, %0, %cst {dimension_numbers = #tpu.dot_dimension_numbers<[1], [0], [0], [1], [0, 0, 1, 1], [], []>} : vector<64x128xf32>, vector<128x24xf32>, vector<64x24xf32> -> vector<64x24xf32>
    %7 = vector.extract_strided_slice %6 {offsets = [0, 0], sizes = [64, 8], strides = [1, 1]} : vector<64x24xf32> to vector<64x8xf32>
    %cst_4 = arith.constant 0.353553385 : f32
    %8 = vector.broadcast %cst_4 : f32 to vector<64x8xf32>
    %9 = arith.mulf %7, %8 : vector<64x8xf32>
    %10 = vector.extract_strided_slice %6 {offsets = [0, 8], sizes = [64, 8], strides = [1, 1]} : vector<64x24xf32> to vector<64x8xf32>
    %11 = vector.extract_strided_slice %6 {offsets = [0, 16], sizes = [64, 8], strides = [1, 1]} : vector<64x24xf32> to vector<64x8xf32>
    %cst_5 = arith.constant dense<0.000000e+00> : vector<64x64xf32>
    %12 = tpu.matmul %9, %10, %cst_5 {dimension_numbers = #tpu.dot_dimension_numbers<[1], [1], [0], [0], [0, 0, 1, 0], [], []>} : vector<64x8xf32>, vector<64x8xf32>, vector<64x64xf32> -> vector<64x64xf32>
    %cst_6 = arith.constant -2.38197633E+38 : f32
    %13 = vector.broadcast %cst_6 : f32 to vector<64x64xf32>
    %14 = arith.select %3, %12, %13 : vector<64x64xi1>, vector<64x64xf32>
    %cst_7 = arith.constant dense<0xFF800000> : vector<64xf32>
    %15 = vector.multi_reduction <maximumf>, %14, %cst_7 [1] : vector<64x64xf32> to vector<64xf32>
    %16 = vector.shape_cast %15 : vector<64xf32> to vector<64x1xf32>
    %17 = vector.broadcast %16 : vector<64x1xf32> to vector<64x64xf32>
    %18 = arith.subf %14, %17 : vector<64x64xf32>
    %19 = math.exp %18 : vector<64x64xf32>
    %cst_8 = arith.constant dense<0.000000e+00> : vector<64xf32>
    %20 = vector.multi_reduction <add>, %19, %cst_8 [1] : vector<64x64xf32> to vector<64xf32>
    %21 = vector.shape_cast %20 : vector<64xf32> to vector<64x1xf32>
    %cst_9 = arith.constant dense<0.000000e+00> : vector<64x8xf32>
    %22 = tpu.matmul %19, %11, %cst_9 {dimension_numbers = #tpu.dot_dimension_numbers<[1], [0], [0], [1], [0, 0, 1, 1], [], []>} : vector<64x64xf32>, vector<64x8xf32>, vector<64x8xf32> -> vector<64x8xf32>
    %23 = tpu.reciprocal %21 {approx = true} : vector<64x1xf32> -> vector<64x1xf32>
    %24 = vector.broadcast %23 : vector<64x1xf32> to vector<64x8xf32>
    %25 = arith.mulf %22, %24 : vector<64x8xf32>
    %c0_10 = arith.constant 0 : index
    %c0_11 = arith.constant 0 : index
    %c0_12 = arith.constant 0 : index
    %26 = vector.load %arg3[%c0_10, %c0_11, %c0_12] : memref<1x64x8xf32, #tpu.memory_space<vmem>>, vector<1x64x8xf32>
    %27 = vector.shape_cast %26 : vector<1x64x8xf32> to vector<64x8xf32>
    %28 = vector.shape_cast %25 : vector<64x8xf32> to vector<1x64x8xf32>
    tpu.vector_store %arg3[%c0_10, %c0_11, %c0_12], %28 {strides = array<i32>} : memref<1x64x8xf32, #tpu.memory_space<vmem>>, vector<1x64x8xf32>,
    return
  }
  func.func @transform_0(%arg0: i32) -> (i32, i32, i32) {
    %c0_i32 = arith.constant 0 : i32
    %c0_i32_0 = arith.constant 0 : i32
    %c0_i32_1 = arith.constant 0 : i32
    return %arg0, %c0_i32, %c0_i32_0 : i32, i32, i32
  }
  func.func @transform_1(%arg0: i32) -> (i32, i32) {
    %c0_i32 = arith.constant 0 : i32
    %c0_i32_0 = arith.constant 0 : i32
    %c0_i32_1 = arith.constant 0 : i32
    return %c0_i32, %c0_i32_0 : i32, i32
  }
  func.func @transform_2(%arg0: i32) -> (i32, i32, i32) {
    %c0_i32 = arith.constant 0 : i32
    %c0_i32_0 = arith.constant 0 : i32
    %c0_i32_1 = arith.constant 0 : i32
    return %arg0, %c0_i32, %c0_i32_0 : i32, i32, i32
  }
}

</mosaic_0001>

<llo_original>
// kernel: tpu_custom_call.1
$region0: #{tpu_custom_call.1}
  #allocation0 [shape = 'u32[]', space=smem, size = 0x4, offset = 0x4, fixed_abs, tag = 'smem constant byte address 0x4 - core index']
  #allocation1 [shape = 'u32[144,128]{1,0:T(1,128)}', space=vmem, size = 0x12000, scoped, tag = 'internal scratch']
  %s0 = inlined_call_operand.vmem [shape: f32[2,64,128], index: 0, kind: input, shape index: {}]
  %s1 = inlined_call_operand.vmem [shape: f32[128,24], index: 1, kind: input, shape index: {}]
  %s2 = inlined_call_operand.vmem [shape: f32[2,64,8], index: 2, kind: output, shape index: {}]
  %s3 = sld [smem:[#allocation0]]
  $region41: #{tpu_custom_call.1} parent=0
    _
  %s5 = ssub.s32 1, %s3
  %s6 = scalar_select 0, %s5, %s3
  loop: start=0, step=1, limit=4
  $region2: #{tpu_custom_call.1} parent=0 // loop_pre_header
    _
  $region3: #{tpu_custom_call.1} parent=0 // loop_header
    %s8 = sphi 0, %s12
    %p9 = scmp.ge.s32.totalorder %s8, 4
    %s18 = sphi 0, %s20
    %s21 = sphi 0, %s18
    %s22 = sphi 0, %s21
    %s38 = sphi 0, %s22
    %s42 = sphi 0, %s42
    %s44 = sphi 0, %s42
    %s45 = sphi 0, %s44
    %s59 = sphi 0, %s45
    %s65 = sphi 0, %s67
    %s68 = sphi 0, %s65
    %s69 = sphi 0, %s68
    %s85 = sphi 0, %s69
  $region4: #{tpu_custom_call.1} parent=0 // loop_header_branch
    %11 = sbr.rel (%p9) target = $region8
  $region5: #{tpu_custom_call.1} parent=0 // loop_body
    %s13 = ssub.s32 %s8, 1
    %s14 = ssub.s32 %s8, 2
    %s15 = sadd.s32 %s8, 1
    %s16 = ssub.s32 %s8, %s15
    %p17 = scmp.eq.s32.totalorder %s16, 0
    %s19 = sadd.s32 %s18, 1
    %s20 = scalar_select %p17, %s18, %s19
    %p23 = pneg %p17
    %p24 = scmp.eq.s32.totalorder %s8, 1
    %p25 = por %p23, %p24
    %p26 = scmp.ne.s32.totalorder %s18, %s21
    %p27 = scmp.eq.s32.totalorder %s8, 0
    %p28 = por %p26, %p27
    %p29 = scmp.ne.s32.totalorder %s18, %s21
    %p30 = scmp.eq.s32.totalorder %s13, 1
    %p31 = por %p29, %p30
    %p32 = scmp.ne.s32.totalorder %s21, %s22
    %p33 = scmp.eq.s32.totalorder %s13, 0
    %p34 = por %p32, %p33
    %p35 = scmp.ne.s32.totalorder %s21, %s22
    %p36 = scmp.eq.s32.totalorder %s14, 1
    %p37 = por %p35, %p36
    %p39 = scmp.ne.s32.totalorder %s22, %s38
    %p40 = scmp.eq.s32.totalorder %s14, 0
    %p41 = por %p39, %p40
    %s43 = sadd.s32 %s42, 1
    %p46 = scmp.eq.s32.totalorder %s8, 1
    %p47 = scmp.ne.s32.totalorder %s42, %s44
    %p48 = scmp.eq.s32.totalorder %s8, 0
    %p49 = por %p47, %p48
    %p50 = scmp.ne.s32.totalorder %s42, %s44
    %p51 = scmp.eq.s32.totalorder %s13, 1
    %p52 = por %p50, %p51
    %p53 = scmp.ne.s32.totalorder %s44, %s45
    %p54 = scmp.eq.s32.totalorder %s13, 0
    %p55 = por %p53, %p54
    %p56 = scmp.ne.s32.totalorder %s44, %s45
    %p57 = scmp.eq.s32.totalorder %s14, 1
    %p58 = por %p56, %p57
    %p60 = scmp.ne.s32.totalorder %s45, %s59
    %p61 = scmp.eq.s32.totalorder %s14, 0
    %p62 = por %p60, %p61
    %s63 = ssub.s32 %s8, %s15
    %p64 = scmp.eq.s32.totalorder %s63, 0
    %s66 = sadd.s32 %s65, 1
    %s67 = scalar_select %p64, %s65, %s66
    %p70 = pneg %p64
    %p71 = scmp.eq.s32.totalorder %s8, 1
    %p72 = por %p70, %p71
    %p73 = scmp.ne.s32.totalorder %s65, %s68
    %p74 = scmp.eq.s32.totalorder %s8, 0
    %p75 = por %p73, %p74
    %p76 = scmp.ne.s32.totalorder %s65, %s68
    %p77 = scmp.eq.s32.totalorder %s13, 1
    %p78 = por %p76, %p77
    %p79 = scmp.ne.s32.totalorder %s68, %s69
    %p80 = scmp.eq.s32.totalorder %s13, 0
    %p81 = por %p79, %p80
    %p82 = scmp.ne.s32.totalorder %s68, %s69
    %p83 = scmp.eq.s32.totalorder %s14, 1
    %p84 = por %p82, %p83
    %p86 = scmp.ne.s32.totalorder %s69, %s85
    %p87 = scmp.eq.s32.totalorder %s14, 0
    %p88 = por %p86, %p87
    %p89 = scmp.le.s32.totalorder 1, %s8
    %p90 = scmp.lt.s32.totalorder %s8, 3
    %p91 = pnand %p89, %p90
    %p92 = pneg %p91
    // Predicated region
    $region9: #{tpu_custom_call.1} parent=5 // pred_check
      _
    $region10: #{tpu_custom_call.1} parent=5 // pred_check_branch
      %94 = sbr.rel (%p91) target = $region12
    $region11: #{tpu_custom_call.1} parent=5 // pred_region
      %s95 = ssub.s32 %s8, 1
      // Predicated region
      $region13: #{tpu_custom_call.1} parent=11 // pred_check
        %p96 = pneg %p55
      $region14: #{tpu_custom_call.1} parent=11 // pred_check_branch
        %98 = sbr.rel (%p96) target = $region16
      $region15: #{tpu_custom_call.1} parent=11 // pred_region
        _
      $region16: #{tpu_custom_call.1} parent=11 // pred_fallthru
        _
    $region12: #{tpu_custom_call.1} parent=5 // pred_fallthru
      _
    %p99 = scmp.lt.s32.totalorder %s8, 2
    // Predicated region
    $region17: #{tpu_custom_call.1} parent=5 // pred_check
      %p100 = pneg %p99
    $region18: #{tpu_custom_call.1} parent=5 // pred_check_branch
      %102 = sbr.rel (%p100) target = $region20
    $region19: #{tpu_custom_call.1} parent=5 // pred_region
      // Predicated region
      $region21: #{tpu_custom_call.1} parent=19 // pred_check
        %p103 = pneg %p28
      $region22: #{tpu_custom_call.1} parent=19 // pred_check_branch
        %105 = sbr.rel (%p103) target = $region24
      $region23: #{tpu_custom_call.1} parent=19 // pred_region
        %p106 = scmp.lt.s32.totalorder %s8, 1
        %s107 = scalar_select %p106, %s8, 1
        %s108 = smul.addr %s107, 8
        %s109 = smul.addr %s108, 8
        %s110 = scalar_lea.vmem %s0, %s109
      $region24: #{tpu_custom_call.1} parent=19 // pred_fallthru
        _
    $region20: #{tpu_custom_call.1} parent=5 // pred_fallthru
      _
    %p111 = scmp.le.s32.totalorder 1, %s8
    %p112 = scmp.lt.s32.totalorder %s8, 3
    %p113 = pnand %p111, %p112
    %p114 = pneg %p113
    // Predicated region
    $region25: #{tpu_custom_call.1} parent=5 // pred_check
      _
    $region26: #{tpu_custom_call.1} parent=5 // pred_check_branch
      %116 = sbr.rel (%p113) target = $region28
    $region27: #{tpu_custom_call.1} parent=5 // pred_region
      %s117 = ssub.s32 %s8, 1
      %p118 = scmp.lt.s32.totalorder %s13, 1
      %s119 = scalar_select %p118, %s13, 1
      %s120 = smul.addr %s119, 8
      %s121 = smul.addr %s120, 8
      %s122 = scalar_lea.vmem %s0, %s121
      %p123 = pneg %p34
      %p124 = pneg %p31
      %p125 = pneg %p55
      %p126 = pneg %p52
      %p127 = pneg %p81
      %p128 = pneg %p78
      %p129 = scmp.lt.s32.totalorder %s13, 1
      %s130 = scalar_select %p129, %s13, 1
      %s131 = smul.addr %s130, 8
      %s132 = smul.addr %s131, 8
      %s133 = scalar_lea.vmem %s2, %s132
      %p134 = scmp.lt.s32.totalorder %s13, 1
      %s135 = scalar_select %p134, %s13, 1
      %s136 = smul.addr %s135, 8
      %s137 = smul.addr %s136, 8
      %s138 = scalar_lea.vmem %s0, %s137
      %p139 = scmp.lt.s32.totalorder %s13, 1
      %s140 = scalar_select %p139, %s13, 1
      %s141 = smul.addr %s140, 8
      %s142 = smul.addr %s141, 8
      %s143 = scalar_lea.vmem %s2, %s142
      %v144 = vld [vmem:[%s1] sm:$0xff]
      %v145 = vld [vmem:[%s1 + $0x8] sm:$0xff]
      %v146 = vld [vmem:[%s1 + $0x10] sm:$0xff]
      %v147 = vld [vmem:[%s1 + $0x18] sm:$0xff]
      %v148 = vld [vmem:[%s1 + $0x20] sm:$0xff]
      %v149 = vld [vmem:[%s1 + $0x28] sm:$0xff]
      %v150 = vld [vmem:[%s1 + $0x30] sm:$0xff]
      %v151 = vld [vmem:[%s1 + $0x38] sm:$0xff]
      %v152 = vld [vmem:[%s1 + $0x40] sm:$0xff]
      %v153 = vld [vmem:[%s1 + $0x48] sm:$0xff]
      %v154 = vld [vmem:[%s1 + $0x50] sm:$0xff]
      %v155 = vld [vmem:[%s1 + $0x58] sm:$0xff]
      %v156 = vld [vmem:[%s1 + $0x60] sm:$0xff]
      %v157 = vld [vmem:[%s1 + $0x68] sm:$0xff]
      %v158 = vld [vmem:[%s1 + $0x70] sm:$0xff]
      %v159 = vld [vmem:[%s1 + $0x78] sm:$0xff]
      %v160 = vlaneseq
      %v161 = vshrl.u32 %v160, 7
      %v162 = vadd.s32 %v161, 8
      %v163 = vadd.s32 %v161, 16
      %v164 = vadd.s32 %v161, 24
      %v165 = vadd.s32 %v161, 32
      %v166 = vadd.s32 %v161, 40
      %v167 = vadd.s32 %v161, 48
      %v168 = vadd.s32 %v161, 56
      %v169 = vlaneseq
      %v170 = vand.u32 %v169, 127
      %vm171 = vcmp.ge.s32.totalorder %v161, %v170
      %vm172 = vcmp.ge.s32.totalorder %v162, %v170
      %vm173 = vcmp.ge.s32.totalorder %v163, %v170
      %vm174 = vcmp.ge.s32.totalorder %v164, %v170
      %vm175 = vcmp.ge.s32.totalorder %v165, %v170
      %vm176 = vcmp.ge.s32.totalorder %v166, %v170
      %vm177 = vcmp.ge.s32.totalorder %v167, %v170
      %vm178 = vcmp.ge.s32.totalorder %v168, %v170
      %v179 = vld [vmem:[%s138] sm:$0xff]
      %v180 = vld [vmem:[%s138 + $0x8] sm:$0xff]
      %v181 = vld [vmem:[%s138 + $0x10] sm:$0xff]
      %v182 = vld [vmem:[%s138 + $0x18] sm:$0xff]
      %v183 = vld [vmem:[%s138 + $0x20] sm:$0xff]
      %v184 = vld [vmem:[%s138 + $0x28] sm:$0xff]
      %v185 = vld [vmem:[%s138 + $0x30] sm:$0xff]
      %v186 = vld [vmem:[%s138 + $0x38] sm:$0xff]
      %187 = vmatprep.subr.mxu0 0.0
      %188 = vmatpush1.msra.mxu0 %v144
      %189 = vmatprep.subr.mxu0 0.0
      %190 = vmatpush1.msra.mxu0 %v145
      %191 = vmatprep.subr.mxu0 0.0
      %192 = vmatpush1.msra.mxu0 %v146
      %193 = vmatprep.subr.mxu0 0.0
      %194 = vmatpush1.msra.mxu0 %v147
      %195 = vmatprep.subr.mxu0 0.0
      %196 = vmatpush1.msra.mxu0 %v148
      %197 = vmatprep.subr.mxu0 0.0
      %198 = vmatpush1.msra.mxu0 %v149
      %199 = vmatprep.subr.mxu0 0.0
      %200 = vmatpush1.msra.mxu0 %v150
      %201 = vmatprep.subr.mxu0 0.0
      %202 = vmatpush1.msra.mxu0 %v151
      %203 = vmatprep.subr.mxu0 0.0
      %204 = vmatpush1.msra.mxu0 %v152
      %205 = vmatprep.subr.mxu0 0.0
      %206 = vmatpush1.msra.mxu0 %v153
      %207 = vmatprep.subr.mxu0 0.0
      %208 = vmatpush1.msra.mxu0 %v154
      %209 = vmatprep.subr.mxu0 0.0
      %210 = vmatpush1.msra.mxu0 %v155
      %211 = vmatprep.subr.mxu0 0.0
      %212 = vmatpush1.msra.mxu0 %v156
      %213 = vmatprep.subr.mxu0 0.0
      %214 = vmatpush1.msra.mxu0 %v157
      %215 = vmatprep.subr.mxu0 0.0
      %216 = vmatpush1.msra.mxu0 %v158
      %217 = vmatprep.subr.mxu0 0.0
      %218 = vmatpush1.msra.mxu0 %v159
      %219 = vmatprep.subr.mxu0 0.0
      %220 = vmatpush1.msra.mxu0 0.0
      %221 = vmatprep.subr.mxu0 0.0
      %222 = vmatpush1.msra.mxu0 0.0
      %223 = vmatprep.subr.mxu0 0.0
      %224 = vmatpush1.msra.mxu0 0.0
      %225 = vmatprep.subr.mxu0 0.0
      %226 = vmatpush1.msra.mxu0 0.0
      %227 = vmatprep.subr.mxu0 0.0
      %228 = vmatpush1.msra.mxu0 0.0
      %229 = vmatprep.subr.mxu0 0.0
      %230 = vmatpush1.msra.mxu0 0.0
      %231 = vmatprep.subr.mxu0 0.0
      %232 = vmatpush1.msra.mxu0 0.0
      %233 = vmatprep.subr.mxu0 0.0
      %234 = vmatpush1.msra.mxu0 0.0
      %235 = vmatprep.subr.mxu0 0.0
      %236 = vmatpush1.msra.mxu0 0.0
      %237 = vmatprep.subr.mxu0 0.0
      %238 = vmatpush1.msra.mxu0 0.0
      %239 = vmatprep.subr.mxu0 0.0
      %240 = vmatpush1.msra.mxu0 0.0
      %241 = vmatprep.subr.mxu0 0.0
      %242 = vmatpush1.msra.mxu0 0.0
      %243 = vmatprep.subr.mxu0 0.0
      %244 = vmatpush1.msra.mxu0 0.0
      %245 = vmatprep.subr.mxu0 0.0
      %246 = vmatpush1.msra.mxu0 0.0
      %247 = vmatprep.subr.mxu0 0.0
      %248 = vmatpush1.msra.mxu0 0.0
      %249 = vmatprep.subr.mxu0 0.0
      %250 = vmatpush1.msra.mxu0 0.0
      %251 = vmatprep.mubr.f32.mxu0 0.0
      %252 = vmatmul.mubr.f32.gmra.mrb[0].mxu0 %v179
      %v253 = vpop.f32.mrb[0].mxu0
      %v254 = vadd.f32 0.0, %v253
      %v255 = vpop.f32.mrb[0].mxu0
      %256 = vmatprep.mubr.f32.mxu0 0.0
      %257 = vmatmul.mubr.f32.gmra.mrb[0].mxu0 %v180
      %v258 = vpop.f32.mrb[0].mxu0
      %v259 = vadd.f32 0.0, %v258
      %v260 = vpop.f32.mrb[0].mxu0
      %261 = vmatprep.mubr.f32.mxu0 0.0
      %262 = vmatmul.mubr.f32.gmra.mrb[0].mxu0 %v181
      %v263 = vpop.f32.mrb[0].mxu0
      %v264 = vadd.f32 0.0, %v263
      %v265 = vpop.f32.mrb[0].mxu0
      %266 = vmatprep.mubr.f32.mxu0 0.0
      %267 = vmatmul.mubr.f32.gmra.mrb[0].mxu0 %v182
      %v268 = vpop.f32.mrb[0].mxu0
      %v269 = vadd.f32 0.0, %v268
      %v270 = vpop.f32.mrb[0].mxu0
      %271 = vmatprep.mubr.f32.mxu0 0.0
      %272 = vmatmul.mubr.f32.gmra.mrb[0].mxu0 %v183
      %v273 = vpop.f32.mrb[0].mxu0
      %v274 = vadd.f32 0.0, %v273
      %v275 = vpop.f32.mrb[0].mxu0
      %276 = vmatprep.mubr.f32.mxu0 0.0
      %277 = vmatmul.mubr.f32.gmra.mrb[0].mxu0 %v184
      %v278 = vpop.f32.mrb[0].mxu0
      %v279 = vadd.f32 0.0, %v278
      %v280 = vpop.f32.mrb[0].mxu0
      %281 = vmatprep.mubr.f32.mxu0 0.0
      %282 = vmatmul.mubr.f32.gmra.mrb[0].mxu0 %v185
      %v283 = vpop.f32.mrb[0].mxu0
      %v284 = vadd.f32 0.0, %v283
      %v285 = vpop.f32.mrb[0].mxu0
      %286 = vmatprep.mubr.f32.mxu0 0.0
      %287 = vmatmul.mubr.f32.gmra.mrb[0].mxu0 %v186
      %v288 = vpop.f32.mrb[0].mxu0
      %v289 = vadd.f32 0.0, %v288
      %v290 = vpop.f32.mrb[0].mxu0
      %291 = vdwg.mxu0
      %v292 = vmul.f32 %v254, 0.35355338
      %v293 = vmul.f32 %v259, 0.35355338
      %v294 = vmul.f32 %v264, 0.35355338
      %v295 = vmul.f32 %v269, 0.35355338
      %v296 = vmul.f32 %v274, 0.35355338
      %v297 = vmul.f32 %v279, 0.35355338
      %v298 = vmul.f32 %v284, 0.35355338
      %v299 = vmul.f32 %v289, 0.35355338
      %308 = vrot.lane.b32.xlu0 %v254, 120
      %v309 = vpop.permute.xlu0 %308
      %310 = vrot.lane.b32.xlu0 %v259, 120
      %v311 = vpop.permute.xlu0 %310
      %312 = vrot.lane.b32.xlu0 %v264, 120
      %v313 = vpop.permute.xlu0 %312
      %314 = vrot.lane.b32.xlu0 %v269, 120
      %v315 = vpop.permute.xlu0 %314
      %316 = vrot.lane.b32.xlu0 %v274, 120
      %v317 = vpop.permute.xlu0 %316
      %318 = vrot.lane.b32.xlu0 %v279, 120
      %v319 = vpop.permute.xlu0 %318
      %320 = vrot.lane.b32.xlu0 %v284, 120
      %v321 = vpop.permute.xlu0 %320
      %322 = vrot.lane.b32.xlu0 %v289, 120
      %v323 = vpop.permute.xlu0 %322
      %vm324 = vcmask 64512
      %v326 = vsel %vm324, %v292, 0
      %v329 = vsel %vm324, %v293, 0
      %v332 = vsel %vm324, %v294, 0
      %v335 = vsel %vm324, %v295, 0
      %v338 = vsel %vm324, %v296, 0
      %v341 = vsel %vm324, %v297, 0
      %v344 = vsel %vm324, %v298, 0
      %v347 = vsel %vm324, %v299, 0
      %v349 = vsel %vm324, %v309, 0
      %v351 = vsel %vm324, %v311, 0
      %v353 = vsel %vm324, %v313, 0
      %v355 = vsel %vm324, %v315, 0
      %v357 = vsel %vm324, %v317, 0
      %v359 = vsel %vm324, %v319, 0
      %v361 = vsel %vm324, %v321, 0
      %v363 = vsel %vm324, %v323, 0
      %365 = vmatprep.subr.mxu0 0.0
      %366 = vmatpush1.xpose.msra.mxu0 %v349
      %367 = vmatprep.subr.mxu0 0.0
      %368 = vmatpush1.xpose.msra.mxu0 %v351
      %369 = vmatprep.subr.mxu0 0.0
      %370 = vmatpush1.xpose.msra.mxu0 %v353
      %371 = vmatprep.subr.mxu0 0.0
      %372 = vmatpush1.xpose.msra.mxu0 %v355
      %373 = vmatprep.subr.mxu0 0.0
      %374 = vmatpush1.xpose.msra.mxu0 %v357
      %375 = vmatprep.subr.mxu0 0.0
      %376 = vmatpush1.xpose.msra.mxu0 %v359
      %377 = vmatprep.subr.mxu0 0.0
      %378 = vmatpush1.xpose.msra.mxu0 %v361
      %379 = vmatprep.subr.mxu0 0.0
      %380 = vmatpush1.xpose.msra.mxu0 %v363
      %381 = vmatprep.subr.mxu0 0.0
      %382 = vmatpush1.xpose.msra.mxu0 0.0
      %383 = vmatprep.subr.mxu0 0.0
      %384 = vmatpush1.xpose.msra.mxu0 0.0
      %385 = vmatprep.subr.mxu0 0.0
      %386 = vmatpush1.xpose.msra.mxu0 0.0
      %387 = vmatprep.subr.mxu0 0.0
      %388 = vmatpush1.xpose.msra.mxu0 0.0
      %389 = vmatprep.subr.mxu0 0.0
      %390 = vmatpush1.xpose.msra.mxu0 0.0
      %391 = vmatprep.subr.mxu0 0.0
      %392 = vmatpush1.xpose.msra.mxu0 0.0
      %393 = vmatprep.subr.mxu0 0.0
      %394 = vmatpush1.xpose.msra.mxu0 0.0
      %395 = vmatprep.subr.mxu0 0.0
      %396 = vmatpush1.xpose.msra.mxu0 0.0
      %397 = vmatprep.subr.mxu0 0.0
      %398 = vmatpush1.xpose.msra.mxu0 0.0
      %399 = vmatprep.subr.mxu0 0.0
      %400 = vmatpush1.xpose.msra.mxu0 0.0
      %401 = vmatprep.subr.mxu0 0.0
      %402 = vmatpush1.xpose.msra.mxu0 0.0
      %403 = vmatprep.subr.mxu0 0.0
      %404 = vmatpush1.xpose.msra.mxu0 0.0
      %405 = vmatprep.subr.mxu0 0.0
      %406 = vmatpush1.xpose.msra.mxu0 0.0
      %407 = vmatprep.subr.mxu0 0.0
      %408 = vmatpush1.xpose.msra.mxu0 0.0
      %409 = vmatprep.subr.mxu0 0.0
      %410 = vmatpush1.xpose.msra.mxu0 0.0
      %411 = vmatprep.subr.mxu0 0.0
      %412 = vmatpush1.xpose.msra.mxu0 0.0
      %413 = vmatprep.subr.mxu0 0.0
      %414 = vmatpush1.xpose.msra.mxu0 0.0
      %415 = vmatprep.subr.mxu0 0.0
      %416 = vmatpush1.xpose.msra.mxu0 0.0
      %417 = vmatprep.subr.mxu0 0.0
      %418 = vmatpush1.xpose.msra.mxu0 0.0
      %419 = vmatprep.subr.mxu0 0.0
      %420 = vmatpush1.xpose.msra.mxu0 0.0
      %421 = vmatprep.subr.mxu0 0.0
      %422 = vmatpush1.xpose.msra.mxu0 0.0
      %423 = vmatprep.subr.mxu0 0.0
      %424 = vmatpush1.xpose.msra.mxu0 0.0
      %425 = vmatprep.subr.mxu0 0.0
      %426 = vmatpush1.xpose.msra.mxu0 0.0
      %427 = vmatprep.subr.mxu0 0.0
      %428 = vmatpush1.xpose.msra.mxu0 0.0
      %429 = vmatprep.mubr.f32.mxu0 0.0
      %430 = vmatmul.mubr.f32.gmra.mrb[0].mxu0 %v326
      %v431 = vpop.f32.mrb[0].mxu0
      %v432 = vadd.f32 0.0, %v431
      %v433 = vpop.f32.mrb[0].mxu0
      %434 = vmatprep.mubr.f32.mxu0 0.0
      %435 = vmatmul.mubr.f32.gmra.mrb[0].mxu0 %v329
      %v436 = vpop.f32.mrb[0].mxu0
      %v437 = vadd.f32 0.0, %v436
      %v438 = vpop.f32.mrb[0].mxu0
      %439 = vmatprep.mubr.f32.mxu0 0.0
      %440 = vmatmul.mubr.f32.gmra.mrb[0].mxu0 %v332
      %v441 = vpop.f32.mrb[0].mxu0
      %v442 = vadd.f32 0.0, %v441
      %v443 = vpop.f32.mrb[0].mxu0
      %444 = vmatprep.mubr.f32.mxu0 0.0
      %445 = vmatmul.mubr.f32.gmra.mrb[0].mxu0 %v335
      %v446 = vpop.f32.mrb[0].mxu0
      %v447 = vadd.f32 0.0, %v446
      %v448 = vpop.f32.mrb[0].mxu0
      %449 = vmatprep.mubr.f32.mxu0 0.0
      %450 = vmatmul.mubr.f32.gmra.mrb[0].mxu0 %v338
      %v451 = vpop.f32.mrb[0].mxu0
      %v452 = vadd.f32 0.0, %v451
      %v453 = vpop.f32.mrb[0].mxu0
      %454 = vmatprep.mubr.f32.mxu0 0.0
      %455 = vmatmul.mubr.f32.gmra.mrb[0].mxu0 %v341
      %v456 = vpop.f32.mrb[0].mxu0
      %v457 = vadd.f32 0.0, %v456
      %v458 = vpop.f32.mrb[0].mxu0
      %459 = vmatprep.mubr.f32.mxu0 0.0
      %460 = vmatmul.mubr.f32.gmra.mrb[0].mxu0 %v344
      %v461 = vpop.f32.mrb[0].mxu0
      %v462 = vadd.f32 0.0, %v461
      %v463 = vpop.f32.mrb[0].mxu0
      %464 = vmatprep.mubr.f32.mxu0 0.0
      %465 = vmatmul.mubr.f32.gmra.mrb[0].mxu0 %v347
      %v466 = vpop.f32.mrb[0].mxu0
      %v467 = vadd.f32 0.0, %v466
      %v468 = vpop.f32.mrb[0].mxu0
      %469 = vdwg.mxu0
      %v470 = vsel %vm171, %v432, -2.3819763e+38
      %v471 = vsel %vm172, %v437, -2.3819763e+38
      %v472 = vsel %vm173, %v442, -2.3819763e+38
      %v473 = vsel %vm174, %v447, -2.3819763e+38
      %v474 = vsel %vm175, %v452, -2.3819763e+38
      %v475 = vsel %vm176, %v457, -2.3819763e+38
      %v476 = vsel %vm177, %v462, -2.3819763e+38
      %v477 = vsel %vm178, %v467, -2.3819763e+38
      %vm478 = vcmask 523264
      %v479 = vsel %vm478, %v470, -inf
      %480 = vmax.xlane.f32.xlu0 %v479
      %v481 = vpop.xlane.xlu0 %480
      %v482 = vsel %vm478, %v471, -inf
      %483 = vmax.xlane.f32.xlu0 %v482
      %v484 = vpop.xlane.xlu0 %483
      %v485 = vsel %vm478, %v472, -inf
      %486 = vmax.xlane.f32.xlu0 %v485
      %v487 = vpop.xlane.xlu0 %486
      %v488 = vsel %vm478, %v473, -inf
      %489 = vmax.xlane.f32.xlu0 %v488
      %v490 = vpop.xlane.xlu0 %489
      %v491 = vsel %vm478, %v474, -inf
      %492 = vmax.xlane.f32.xlu0 %v491
      %v493 = vpop.xlane.xlu0 %492
      %v494 = vsel %vm478, %v475, -inf
      %495 = vmax.xlane.f32.xlu0 %v494
      %v496 = vpop.xlane.xlu0 %495
      %v497 = vsel %vm478, %v476, -inf
      %498 = vmax.xlane.f32.xlu0 %v497
      %v499 = vpop.xlane.xlu0 %498
      %v500 = vsel %vm478, %v477, -inf
      %501 = vmax.xlane.f32.xlu0 %v500
      %v502 = vpop.xlane.xlu0 %501
      %v503 = vsub.f32 %v470, %v481
      %v504 = vsub.f32 %v471, %v484
      %v505 = vsub.f32 %v472, %v487
      %v506 = vsub.f32 %v473, %v490
      %v507 = vsub.f32 %v474, %v493
      %v508 = vsub.f32 %v475, %v496
      %v509 = vsub.f32 %v476, %v499
      %v510 = vsub.f32 %v477, %v502
      %v511 = vmul.f32 %v503, 1.442695
      %v512 = vpow.pop %v511
      %v513 = vmul.f32 %v504, 1.442695
      %v514 = vpow.pop %v513
      %v515 = vmul.f32 %v505, 1.442695
      %v516 = vpow.pop %v515
      %v517 = vmul.f32 %v506, 1.442695
      %v518 = vpow.pop %v517
      %v519 = vmul.f32 %v507, 1.442695
      %v520 = vpow.pop %v519
      %v521 = vmul.f32 %v508, 1.442695
      %v522 = vpow.pop %v521
      %v523 = vmul.f32 %v509, 1.442695
      %v524 = vpow.pop %v523
      %v525 = vmul.f32 %v510, 1.442695
      %v526 = vpow.pop %v525
      %v527 = vsel %vm478, %v512, 0.0
      %528 = vadd.xlane.f32.xlu0 %v527
      %v529 = vpop.xlane.xlu0 %528
      %v530 = vsel %vm478, %v514, 0.0
      %531 = vadd.xlane.f32.xlu0 %v530
      %v532 = vpop.xlane.xlu0 %531
      %v533 = vsel %vm478, %v516, 0.0
      %534 = vadd.xlane.f32.xlu0 %v533
      %v535 = vpop.xlane.xlu0 %534
      %v536 = vsel %vm478, %v518, 0.0
      %537 = vadd.xlane.f32.xlu0 %v536
      %v538 = vpop.xlane.xlu0 %537
      %v539 = vsel %vm478, %v520, 0.0
      %540 = vadd.xlane.f32.xlu0 %v539
      %v541 = vpop.xlane.xlu0 %540
      %v542 = vsel %vm478, %v522, 0.0
      %543 = vadd.xlane.f32.xlu0 %v542
      %v544 = vpop.xlane.xlu0 %543
      %v545 = vsel %vm478, %v524, 0.0
      %546 = vadd.xlane.f32.xlu0 %v545
      %v547 = vpop.xlane.xlu0 %546
      %v548 = vsel %vm478, %v526, 0.0
      %549 = vadd.xlane.f32.xlu0 %v548
      %v550 = vpop.xlane.xlu0 %549
      %551 = vrot.lane.b32.xlu0 %v254, 112
      %v552 = vpop.permute.xlu0 %551
      %553 = vrot.lane.b32.xlu0 %v259, 112
      %v554 = vpop.permute.xlu0 %553
      %555 = vrot.lane.b32.xlu0 %v264, 112
      %v556 = vpop.permute.xlu0 %555
      %557 = vrot.lane.b32.xlu0 %v269, 112
      %v558 = vpop.permute.xlu0 %557
      %559 = vrot.lane.b32.xlu0 %v274, 112
      %v560 = vpop.permute.xlu0 %559
      %561 = vrot.lane.b32.xlu0 %v279, 112
      %v562 = vpop.permute.xlu0 %561
      %563 = vrot.lane.b32.xlu0 %v284, 112
      %v564 = vpop.permute.xlu0 %563
      %565 = vrot.lane.b32.xlu0 %v289, 112
      %v566 = vpop.permute.xlu0 %565
      %v576 = vsel %vm478, %v512, 0
      %v579 = vsel %vm478, %v514, 0
      %v582 = vsel %vm478, %v516, 0
      %v585 = vsel %vm478, %v518, 0
      %v588 = vsel %vm478, %v520, 0
      %v591 = vsel %vm478, %v522, 0
      %v594 = vsel %vm478, %v524, 0
      %v597 = vsel %vm478, %v526, 0
      %599 = vmatprep.subr.mxu0 0.0
      %600 = vmatpush1.msra.mxu0 %v552
      %601 = vmatprep.subr.mxu0 0.0
      %602 = vmatpush1.msra.mxu0 %v554
      %603 = vmatprep.subr.mxu0 0.0
      %604 = vmatpush1.msra.mxu0 %v556
      %605 = vmatprep.subr.mxu0 0.0
      %606 = vmatpush1.msra.mxu0 %v558
      %607 = vmatprep.subr.mxu0 0.0
      %608 = vmatpush1.msra.mxu0 %v560
      %609 = vmatprep.subr.mxu0 0.0
      %610 = vmatpush1.msra.mxu0 %v562
      %611 = vmatprep.subr.mxu0 0.0
      %612 = vmatpush1.msra.mxu0 %v564
      %613 = vmatprep.subr.mxu0 0.0
      %614 = vmatpush1.msra.mxu0 %v566
      %615 = vmatprep.subr.mxu0 0.0
      %616 = vmatpush1.msra.mxu0 0.0
      %617 = vmatprep.subr.mxu0 0.0
      %618 = vmatpush1.msra.mxu0 0.0
      %619 = vmatprep.subr.mxu0 0.0
      %620 = vmatpush1.msra.mxu0 0.0
      %621 = vmatprep.subr.mxu0 0.0
      %622 = vmatpush1.msra.mxu0 0.0
      %623 = vmatprep.subr.mxu0 0.0
      %624 = vmatpush1.msra.mxu0 0.0
      %625 = vmatprep.subr.mxu0 0.0
      %626 = vmatpush1.msra.mxu0 0.0
      %627 = vmatprep.subr.mxu0 0.0
      %628 = vmatpush1.msra.mxu0 0.0
      %629 = vmatprep.subr.mxu0 0.0
      %630 = vmatpush1.msra.mxu0 0.0
      %631 = vmatprep.subr.mxu0 0.0
      %632 = vmatpush1.msra.mxu0 0.0
      %633 = vmatprep.subr.mxu0 0.0
      %634 = vmatpush1.msra.mxu0 0.0
      %635 = vmatprep.subr.mxu0 0.0
      %636 = vmatpush1.msra.mxu0 0.0
      %637 = vmatprep.subr.mxu0 0.0
      %638 = vmatpush1.msra.mxu0 0.0
      %639 = vmatprep.subr.mxu0 0.0
      %640 = vmatpush1.msra.mxu0 0.0
      %641 = vmatprep.subr.mxu0 0.0
      %642 = vmatpush1.msra.mxu0 0.0
      %643 = vmatprep.subr.mxu0 0.0
      %644 = vmatpush1.msra.mxu0 0.0
      %645 = vmatprep.subr.mxu0 0.0
      %646 = vmatpush1.msra.mxu0 0.0
      %647 = vmatprep.subr.mxu0 0.0
      %648 = vmatpush1.msra.mxu0 0.0
      %649 = vmatprep.subr.mxu0 0.0
      %650 = vmatpush1.msra.mxu0 0.0
      %651 = vmatprep.subr.mxu0 0.0
      %652 = vmatpush1.msra.mxu0 0.0
      %653 = vmatprep.subr.mxu0 0.0
      %654 = vmatpush1.msra.mxu0 0.0
      %655 = vmatprep.subr.mxu0 0.0
      %656 = vmatpush1.msra.mxu0 0.0
      %657 = vmatprep.subr.mxu0 0.0
      %658 = vmatpush1.msra.mxu0 0.0
      %659 = vmatprep.subr.mxu0 0.0
      %660 = vmatpush1.msra.mxu0 0.0
      %661 = vmatprep.subr.mxu0 0.0
      %662 = vmatpush1.msra.mxu0 0.0
      %663 = vmatprep.mubr.f32.mxu0 0.0
      %664 = vmatmul.mubr.f32.gmra.mrb[0].mxu0 %v576
      %v665 = vpop.f32.mrb[0].mxu0
      %v666 = vadd.f32 0.0, %v665
      %v667 = vpop.f32.mrb[0].mxu0
      %668 = vmatprep.mubr.f32.mxu0 0.0
      %669 = vmatmul.mubr.f32.gmra.mrb[0].mxu0 %v579
      %v670 = vpop.f32.mrb[0].mxu0
      %v671 = vadd.f32 0.0, %v670
      %v672 = vpop.f32.mrb[0].mxu0
      %673 = vmatprep.mubr.f32.mxu0 0.0
      %674 = vmatmul.mubr.f32.gmra.mrb[0].mxu0 %v582
      %v675 = vpop.f32.mrb[0].mxu0
      %v676 = vadd.f32 0.0, %v675
      %v677 = vpop.f32.mrb[0].mxu0
      %678 = vmatprep.mubr.f32.mxu0 0.0
      %679 = vmatmul.mubr.f32.gmra.mrb[0].mxu0 %v585
      %v680 = vpop.f32.mrb[0].mxu0
      %v681 = vadd.f32 0.0, %v680
      %v682 = vpop.f32.mrb[0].mxu0
      %683 = vmatprep.mubr.f32.mxu0 0.0
      %684 = vmatmul.mubr.f32.gmra.mrb[0].mxu0 %v588
      %v685 = vpop.f32.mrb[0].mxu0
      %v686 = vadd.f32 0.0, %v685
      %v687 = vpop.f32.mrb[0].mxu0
      %688 = vmatprep.mubr.f32.mxu0 0.0
      %689 = vmatmul.mubr.f32.gmra.mrb[0].mxu0 %v591
      %v690 = vpop.f32.mrb[0].mxu0
      %v691 = vadd.f32 0.0, %v690
      %v692 = vpop.f32.mrb[0].mxu0
      %693 = vmatprep.mubr.f32.mxu0 0.0
      %694 = vmatmul.mubr.f32.gmra.mrb[0].mxu0 %v594
      %v695 = vpop.f32.mrb[0].mxu0
      %v696 = vadd.f32 0.0, %v695
      %v697 = vpop.f32.mrb[0].mxu0
      %698 = vmatprep.mubr.f32.mxu0 0.0
      %699 = vmatmul.mubr.f32.gmra.mrb[0].mxu0 %v597
      %v700 = vpop.f32.mrb[0].mxu0
      %v701 = vadd.f32 0.0, %v700
      %v702 = vpop.f32.mrb[0].mxu0
      %703 = vdwg.mxu0
      %v704 = vrcp.pop %v529
      %v705 = vrcp.pop %v532
      %v706 = vrcp.pop %v535
      %v707 = vrcp.pop %v538
      %v708 = vrcp.pop %v541
      %v709 = vrcp.pop %v544
      %v710 = vrcp.pop %v547
      %v711 = vrcp.pop %v550
      %v712 = vmul.f32 %v666, %v704
      %v713 = vmul.f32 %v671, %v705
      %v714 = vmul.f32 %v676, %v706
      %v715 = vmul.f32 %v681, %v707
      %v716 = vmul.f32 %v686, %v708
      %v717 = vmul.f32 %v691, %v709
      %v718 = vmul.f32 %v696, %v710
      %v719 = vmul.f32 %v701, %v711
      %720 = vst.msk [vmem:[%s143] sm:$0xff] %vm324, %v712
      %721 = vst.msk [vmem:[%s143 + $0x8] sm:$0xff] %vm324, %v713
      %722 = vst.msk [vmem:[%s143 + $0x10] sm:$0xff] %vm324, %v714
      %723 = vst.msk [vmem:[%s143 + $0x18] sm:$0xff] %vm324, %v715
      %724 = vst.msk [vmem:[%s143 + $0x20] sm:$0xff] %vm324, %v716
      %725 = vst.msk [vmem:[%s143 + $0x28] sm:$0xff] %vm324, %v717
      %726 = vst.msk [vmem:[%s143 + $0x30] sm:$0xff] %vm324, %v718
      %727 = vst.msk [vmem:[%s143 + $0x38] sm:$0xff] %vm324, %v719
      %p728 = scmp.lt.s32.totalorder %s13, 1
      %s729 = scalar_select %p728, %s13, 1
      %s730 = smul.addr %s729, 8
      %s731 = smul.addr %s730, 8
      %s732 = scalar_lea.vmem %s2, %s731
      // Predicated region
      $region29: #{tpu_custom_call.1} parent=27 // pred_check
        %p733 = pneg %p78
      $region30: #{tpu_custom_call.1} parent=27 // pred_check_branch
        %735 = sbr.rel (%p733) target = $region32
      $region31: #{tpu_custom_call.1} parent=27 // pred_region
        _
      $region32: #{tpu_custom_call.1} parent=27 // pred_fallthru
        _
    $region28: #{tpu_custom_call.1} parent=5 // pred_fallthru
      _
    %p736 = scmp.le.s32.totalorder 2, %s8
    // Predicated region
    $region33: #{tpu_custom_call.1} parent=5 // pred_check
      %p737 = pneg %p736
    $region34: #{tpu_custom_call.1} parent=5 // pred_check_branch
      %739 = sbr.rel (%p737) target = $region36
    $region35: #{tpu_custom_call.1} parent=5 // pred_region
      %s740 = ssub.s32 %s8, 2
      // Predicated region
      $region37: #{tpu_custom_call.1} parent=35 // pred_check
        %p741 = pneg %p84
      $region38: #{tpu_custom_call.1} parent=35 // pred_check_branch
        %743 = sbr.rel (%p741) target = $region40
      $region39: #{tpu_custom_call.1} parent=35 // pred_region
        %p744 = scmp.lt.s32.totalorder %s14, 1
        %s745 = scalar_select %p744, %s14, 1
        %s746 = smul.addr %s745, 8
        %s747 = smul.addr %s746, 8
        %s748 = scalar_lea.vmem %s2, %s747
      $region40: #{tpu_custom_call.1} parent=35 // pred_fallthru
        _
    $region36: #{tpu_custom_call.1} parent=5 // pred_fallthru
      _
  $region6: #{tpu_custom_call.1} parent=0 // loop_footer
    %s12 = sadd.s32 1, %s8
  $region7: #{tpu_custom_call.1} parent=0 // loop_footer_branch
    %7 = sbr.rel target = $region3
  $region8: #{tpu_custom_call.1} parent=0 // loop_exit
    _

</llo_original>
